<compile_context>
chip_gen: v5e
topology: v5e:2x2
jax: 0.10.0
libtpu: 0.0.40
codegen_flags: <defaults>
</compile_context>

<pallas_src>
import jax
import jax.numpy as jnp
from jax.experimental import pallas as pl
from jax.experimental.pallas import tpu as pltpu


def _round_up(x, m):
    return ((x + m - 1) // m) * m


def _project_mask_kernel(x_ref, w_ref, b_ref, m_ref, o_ref):
    # o = mask * (x @ W + b); bf16/f32 operands on the MXU, f32 accumulation.
    h = jnp.dot(x_ref[...], w_ref[...], preferred_element_type=jnp.float32)
    h = h + b_ref[...].astype(jnp.float32)
    o_ref[...] = (h * m_ref[...].astype(jnp.float32)).astype(o_ref.dtype)


def coil_project_tokens(hiddens, mask, w_t, b, *, tm=1024,
                        out_dtype=jnp.float32):
    """Masked token projection: mask * (hiddens @ W^T + b).

    hiddens: [B, S, H]  float (bf16 recommended for HBM bandwidth)
    mask:    [B, S]     int
    w_t:     [H, P]     (cast to hiddens.dtype for the MXU)
    b:       [P]        f32
    returns: [B, S, P]  out_dtype
    """
    B, S, H = hiddens.shape
    P = w_t.shape[1]
    M = B * S

    x = hiddens.reshape(M, H)
    m = mask.reshape(M, 1).astype(jnp.int32)

    # Row tile: multiple of 8 sublanes, capped so double-buffered input/output
    # tiles + resident weight fit comfortably in v7x's 32 MiB scoped VMEM.
    tm = min(tm, _round_up(M, 8))
    m_pad = _round_up(M, tm)
    if m_pad != M:
        # TODO(synk): padding copies the activations once; in production pick
        # tm that divides M (e.g. a multiple of S) to avoid this extra pass.
        x = jnp.pad(x, ((0, m_pad - M), (0, 0)))
        m = jnp.pad(m, ((0, m_pad - M), (0, 0)))

    w_t = w_t.astype(x.dtype)
    b = b.reshape(1, P).astype(jnp.float32)

    out = pl.pallas_call(
        _project_mask_kernel,
        out_shape=jax.ShapeDtypeStruct((m_pad, P), out_dtype),
        grid=(m_pad // tm,),
        in_specs=[
            pl.BlockSpec((tm, H), lambda i: (i, 0)),   # activation row stream
            pl.BlockSpec((H, P), lambda i: (0, 0)),    # weight, resident
            pl.BlockSpec((1, P), lambda i: (0, 0)),    # bias, resident
            pl.BlockSpec((tm, 1), lambda i: (i, 0)),   # int32 mask stream
        ],
        out_specs=pl.BlockSpec((tm, P), lambda i: (i, 0)),
        compiler_params=pltpu.CompilerParams(
            dimension_semantics=("parallel",),          # shard rows across TCs
            vmem_limit_bytes=32 * 1024 * 1024,
        ),
    )(x, w_t, b, m)

    if m_pad != M:
        out = out[:M]
    return out.reshape(B, S, P)


def coil_encoder_forward(last_hidden_state, input_ids, attention_mask, params,
                         add_cls=False):
    """Mirrors COILEncoder.forward given the transformer's last hidden state."""
    ret = {}

    # Project ALL S tokens (avoids materializing a [:,1:,:] copy of the [B,S,H]
    # activations in HBM); drop the CLS column of the small [B,S,P] output.
    projected = coil_project_tokens(
        last_hidden_state, attention_mask, params["w_proj_t"], params["b_proj"])
    expert_repr = projected[:, 1:, :]

    if add_cls:
        # Tiny [B,H]@[H,Pc]: left to XLA per perf review (kernel launch + DMA
        # setup would dominate a standalone pallas_call at this size).
        cls_hidden = last_hidden_state[:, 0, :].astype(jnp.float32)
        ret["cls_repr"] = (cls_hidden @ params["w_cls_t"].astype(jnp.float32)
                           + params["b_cls"])

    ret["expert_repr"] = expert_repr
    ret["expert_ids"] = input_ids[:, 1:]
    ret["expert_weights"] = attention_mask[:, 1:]
    ret["attention_mask"] = attention_mask[:, 1:]
    return ret


if __name__ == "__main__":
    # Small, module-consistent shapes.
    B, S, H = 2, 8, 32          # batch, seq, hidden_size
    P, Pc = 32, 16              # projection_dim, cls_projection_dim

    key = jax.random.PRNGKey(0)
    k_h, k_ids, k_wp, k_bp, k_wc, k_bc = jax.random.split(key, 6)

    # Synthetic transformer output (stands in for outputs.hidden_states[-1]),
    # emitted in bf16 as a bf16 backbone would produce it.
    last_hidden_state = jax.random.normal(
        k_h, (B, S, H), dtype=jnp.float32).astype(jnp.bfloat16)
    input_ids = jax.random.randint(k_ids, (B, S), 0, 1000, dtype=jnp.int32)
    attention_mask = jnp.concatenate(
        [jnp.ones((B, S - 2), jnp.int32), jnp.zeros((B, 2), jnp.int32)], axis=1)

    # nn.Linear params: weight ~ N(0, 0.02) as in the module's __init__,
    # bias ~ U(-1/sqrt(H), 1/sqrt(H)) (PyTorch default).
    w_proj = 0.02 * jax.random.normal(k_wp, (P, H), dtype=jnp.float32)   # [out, in]
    b_proj = jax.random.uniform(k_bp, (P,), jnp.float32,
                                minval=-1.0 / jnp.sqrt(H), maxval=1.0 / jnp.sqrt(H))
    w_cls = 0.02 * jax.random.normal(k_wc, (Pc, H), dtype=jnp.float32)
    b_cls = jax.random.uniform(k_bc, (Pc,), jnp.float32,
                               minval=-1.0 / jnp.sqrt(H), maxval=1.0 / jnp.sqrt(H))

    params = {
        "w_proj_t": w_proj.T,   # [H, P]: hidden dim is the contraction axis
        "b_proj": b_proj,
        "w_cls_t": w_cls.T,     # [H, Pc]
        "b_cls": b_cls,
    }

    out = coil_encoder_forward(last_hidden_state, input_ids, attention_mask,
                               params, add_cls=True)
    out = jax.block_until_ready(out)

    # Reference in plain JAX, using the same bf16-rounded operands the kernel sees.
    x32 = last_hidden_state.astype(jnp.float32)
    w32 = w_proj.T.astype(jnp.bfloat16).astype(jnp.float32)
    ref_expert = (attention_mask[:, 1:, None].astype(jnp.float32)
                  * (x32[:, 1:, :] @ w32 + b_proj))
    ref_cls = x32[:, 0, :] @ w_cls.T + b_cls

    assert out["expert_repr"].shape == (B, S - 1, P)
    assert out["cls_repr"].shape == (B, Pc)
    assert out["expert_ids"].shape == (B, S - 1)
    assert out["expert_weights"].shape == (B, S - 1)
    assert jnp.allclose(out["expert_repr"], ref_expert, atol=1e-4, rtol=1e-4)
    assert jnp.allclose(out["cls_repr"], ref_cls, atol=1e-4, rtol=1e-4)
    assert jnp.array_equal(out["expert_ids"], input_ids[:, 1:])
    assert jnp.array_equal(out["expert_weights"], attention_mask[:, 1:])
    assert jnp.array_equal(out["attention_mask"], attention_mask[:, 1:])

    print("KERNEL_OK")
</pallas_src>

<mosaic_0001>
module attributes {stable_mosaic.version = 11 : i64} {
  func.func @_project_mask_kernel(%arg0: i32, %arg1: memref<16x32xbf16, #tpu.memory_space<vmem>>, %arg2: memref<32x32xbf16, #tpu.memory_space<vmem>>, %arg3: memref<1x32xf32, #tpu.memory_space<vmem>>, %arg4: memref<16x1xi32, #tpu.memory_space<vmem>>, %arg5: memref<16x32xf32, #tpu.memory_space<vmem>>) attributes {dimension_semantics = [#tpu.dimension_semantics<parallel>], iteration_bounds = array<i64: 1>, scalar_prefetch = 0 : i64, scratch_operands = 0 : i64, tpu.core_type = #tpu.core_type<tc>, window_params = [{transform_indices = @transform_0, window_bounds = array<i64: 16, 32>}, {pipeline_mode = #tpu.pipeline_mode<synchronous>, transform_indices = @transform_1, window_bounds = array<i64: 32, 32>}, {pipeline_mode = #tpu.pipeline_mode<synchronous>, transform_indices = @transform_2, window_bounds = array<i64: 1, 32>}, {transform_indices = @transform_3, window_bounds = array<i64: 16, 1>}, {transform_indices = @transform_4, window_bounds = array<i64: 16, 32>}]} {
    %c0 = arith.constant 0 : index
    %c0_0 = arith.constant 0 : index
    %0 = vector.load %arg1[%c0, %c0_0] : memref<16x32xbf16, #tpu.memory_space<vmem>>, vector<16x32xbf16>
    %c0_1 = arith.constant 0 : index
    %c0_2 = arith.constant 0 : index
    %1 = vector.load %arg2[%c0_1, %c0_2] : memref<32x32xbf16, #tpu.memory_space<vmem>>, vector<32x32xbf16>
    %cst = arith.constant dense<0.000000e+00> : vector<16x32xf32>
    %2 = tpu.matmul %0, %1, %cst {dimension_numbers = #tpu.dot_dimension_numbers<[1], [0], [0], [1], [0, 0, 1, 1], [], []>} : vector<16x32xbf16>, vector<32x32xbf16>, vector<16x32xf32> -> vector<16x32xf32>
    %c0_3 = arith.constant 0 : index
    %c0_4 = arith.constant 0 : index
    %3 = vector.load %arg3[%c0_3, %c0_4] : memref<1x32xf32, #tpu.memory_space<vmem>>, vector<1x32xf32>
    %4 = vector.broadcast %3 : vector<1x32xf32> to vector<16x32xf32>
    %5 = arith.addf %2, %4 : vector<16x32xf32>
    %c0_5 = arith.constant 0 : index
    %c0_6 = arith.constant 0 : index
    %6 = vector.load %arg4[%c0_5, %c0_6] : memref<16x1xi32, #tpu.memory_space<vmem>>, vector<16x1xi32>
    %7 = arith.sitofp %6 : vector<16x1xi32> to vector<16x1xf32>
    %8 = vector.broadcast %7 : vector<16x1xf32> to vector<16x32xf32>
    %9 = arith.mulf %5, %8 : vector<16x32xf32>
    %c0_7 = arith.constant 0 : index
    %c0_8 = arith.constant 0 : index
    %10 = vector.load %arg5[%c0_7, %c0_8] : memref<16x32xf32, #tpu.memory_space<vmem>>, vector<16x32xf32>
    tpu.vector_store %arg5[%c0_7, %c0_8], %9 {strides = array<i32>} : memref<16x32xf32, #tpu.memory_space<vmem>>, vector<16x32xf32>,
    return
  }
  func.func @transform_0(%arg0: i32) -> (i32, i32) {
    %c0_i32 = arith.constant 0 : i32
    %c0_i32_0 = arith.constant 0 : i32
    return %arg0, %c0_i32 : i32, i32
  }
  func.func @transform_1(%arg0: i32) -> (i32, i32) {
    %c0_i32 = arith.constant 0 : i32
    %c0_i32_0 = arith.constant 0 : i32
    %c0_i32_1 = arith.constant 0 : i32
    return %c0_i32, %c0_i32_0 : i32, i32
  }
  func.func @transform_2(%arg0: i32) -> (i32, i32) {
    %c0_i32 = arith.constant 0 : i32
    %c0_i32_0 = arith.constant 0 : i32
    %c0_i32_1 = arith.constant 0 : i32
    return %c0_i32, %c0_i32_0 : i32, i32
  }
  func.func @transform_3(%arg0: i32) -> (i32, i32) {
    %c0_i32 = arith.constant 0 : i32
    %c0_i32_0 = arith.constant 0 : i32
    return %arg0, %c0_i32 : i32, i32
  }
  func.func @transform_4(%arg0: i32) -> (i32, i32) {
    %c0_i32 = arith.constant 0 : i32
    %c0_i32_0 = arith.constant 0 : i32
    return %arg0, %c0_i32 : i32, i32
  }
}

</mosaic_0001>

<llo_original>
// kernel: tpu_custom_call.1
$region0: #{tpu_custom_call.1}
  #allocation0 [shape = 'u32[]', space=smem, size = 0x4, offset = 0x4, fixed_abs, tag = 'smem constant byte address 0x4 - core index']
  #allocation1 [shape = 'u32[72,128]{1,0:T(1,128)}', space=vmem, size = 0x9000, scoped, tag = 'internal scratch']
  %s0 = inlined_call_operand.hbm [shape: bf16[16,32], index: 0, kind: input, shape index: {}]
  %s1 = inlined_call_operand.vmem [shape: bf16[32,32], index: 1, kind: input, shape index: {}]
  %s2 = inlined_call_operand.vmem [shape: f32[1,32], index: 2, kind: input, shape index: {}]
  %s3 = inlined_call_operand.vmem [shape: s32[16,1], index: 3, kind: input, shape index: {}]
  %s4 = inlined_call_operand.hbm [shape: f32[16,32], index: 4, kind: output, shape index: {}]
  %s5 = sld [smem:[#allocation0]]
  $region30: #{tpu_custom_call.1} parent=0
    _
  %s7 = ssub.s32 1, %s5
  %s8 = scalar_select 0, %s7, %s5
  $region1: #{tpu_custom_call.1} parent=0
    #allocation2 [shape = 'u8[4096]{0}', space=vmem, size = 0x1000, scoped, tag = 'input window, operand 0, single buffered']
    #allocation3 [shape = 's32[1]{0}', space=sflag, size = 0x4, scoped, tag = 'scoped memory for tpu_custom_call.1']
    #allocation4 [shape = 's32[1]{0}', space=sflag, size = 0x4, scoped, tag = 'scoped memory for tpu_custom_call.1']
    #allocation5 [shape = 'u8[8192]{0}', space=vmem, size = 0x2000, scoped, tag = 'output window, operand 0, single buffered']
    %9 = vsyncpa [#allocation3], 0
    %10 = vsyncpa [#allocation4], 0
    // Predicated region
    $region2: #{tpu_custom_call.1} parent=1 // pred_check
      _
    $region3: #{tpu_custom_call.1} parent=1 // pred_check_branch
      %12 = sbr.rel (0) target = $region5
    $region4: #{tpu_custom_call.1} parent=1 // pred_region
      %14 = vsyncadd [#allocation3], 0
      %s15 = sshll.u32 %s0, 4
      %s16 = int_to_ptr.hbm [resolvable:$true] %s15
      %s17 = sshll.u32 [#allocation2], 4
      %s18 = int_to_ptr.vmem [resolvable:$true] %s17
      %23 = dma.hbm_to_vmem [thread:$0]  %s16, 128, %s18, [#allocation3], 64, 64, 4
    $region5: #{tpu_custom_call.1} parent=1 // pred_fallthru
      _
    // Predicated region
    $region6: #{tpu_custom_call.1} parent=1 // pred_check
      _
    $region7: #{tpu_custom_call.1} parent=1 // pred_check_branch
      %25 = sbr.rel (0) target = $region9
    $region8: #{tpu_custom_call.1} parent=1 // pred_region
      _
    $region9: #{tpu_custom_call.1} parent=1 // pred_fallthru
      _
    // Predicated region
    $region10: #{tpu_custom_call.1} parent=1 // pred_check
      _
    $region11: #{tpu_custom_call.1} parent=1 // pred_check_branch
      %27 = sbr.rel (0) target = $region13
    $region12: #{tpu_custom_call.1} parent=1 // pred_region
      _
    $region13: #{tpu_custom_call.1} parent=1 // pred_fallthru
      _
    // Predicated region
    $region14: #{tpu_custom_call.1} parent=1 // pred_check
      _
    $region15: #{tpu_custom_call.1} parent=1 // pred_check_branch
      %29 = sbr.rel (0) target = $region17
    $region16: #{tpu_custom_call.1} parent=1 // pred_region
      _
    $region17: #{tpu_custom_call.1} parent=1 // pred_fallthru
      _
    // Predicated region
    $region18: #{tpu_custom_call.1} parent=1 // pred_check
      _
    $region19: #{tpu_custom_call.1} parent=1 // pred_check_branch
      %31 = sbr.rel (0) target = $region21
    $region20: #{tpu_custom_call.1} parent=1 // pred_region
      %33 = dma.done [#allocation3], 128
    $region21: #{tpu_custom_call.1} parent=1 // pred_fallthru
      _
    %v35 = vld [vmem:[#allocation2] sm:$0xf]
    %v36 = vld [vmem:[#allocation2 + $0x4] sm:$0xf]
    %v37 = vld [vmem:[%s1] sm:$0xf]
    %v38 = vld [vmem:[%s1 + $0x4] sm:$0xf]
    %v39 = vld [vmem:[%s1 + $0x8] sm:$0xf]
    %v40 = vld [vmem:[%s1 + $0xc] sm:$0xf]
    %v41 = vld [vmem:[%s2] sm:$0x1]
    %v43 = vperm.slane %v41, 0
    %v47 = vunpack.c.l.b16 %v35
    %v48 = vunpack.c.l.b16 %v36
    %v49 = vpack.c.b16 %v48, %v47
    %v54 = vunpack.c.l.b16 %v37
    %v55 = vunpack.c.l.b16 %v38
    %v56 = vunpack.c.l.b16 %v39
    %v57 = vunpack.c.l.b16 %v40
    %v58 = vpack.c.b16 %v55, %v54
    %v59 = vpack.c.b16 %v57, %v56
    %vm62 = vcmask 261120
    %v64 = vsel %vm62, %v49, 0
    %66 = vmatpush.bf16.msra.mxu0 0
    %67 = vmatpush.bf16.msra.mxu0 0
    %68 = vmatpush.bf16.msra.mxu0 0
    %69 = vmatpush.bf16.msra.mxu0 0
    %70 = vmatpush.bf16.msra.mxu0 0
    %71 = vmatpush.bf16.msra.mxu0 0
    %72 = vmatpush.bf16.msra.mxu0 %v59
    %73 = vmatpush.bf16.msra.mxu0 %v58
    %74 = vmatmul.bf16.gmra.mxu0 %v64
    %v75 = vpop.f32.mrf.mxu0
    %v76 = vadd.f32 %v43, %v75
    %v77 = vpop.f32.mrf.mxu0
    %v78 = vadd.f32 %v43, %v77
    %79 = vdwg.mxu0
    %v80 = vld [vmem:[%s3] sm:$0xff]
    %v81 = vld [vmem:[%s3 + $0x8] sm:$0xff]
    %v82 = vcvt.s32.f32 %v80
    %v83 = vcvt.s32.f32 %v81
    %85 = vset.pattern.permute.xlu0 0
    %86 = vperm.xlu0 %85, %v82
    %v87 = vpop.permute.xlu0 %86
    %90 = vset.pattern.permute.xlu0 0
    %91 = vperm.xlu0 %90, %v83
    %v92 = vpop.permute.xlu0 %91
    %v94 = vmul.f32 %v76, %v87
    %v95 = vmul.f32 %v78, %v92
    %96 = vst.msk [vmem:[#allocation5] sm:$0xff] %vm62, %v94
    %97 = vst.msk [vmem:[#allocation5 + $0x8] sm:$0xff] %vm62, %v95
    // Predicated region
    $region22: #{tpu_custom_call.1} parent=1 // pred_check
      _
    $region23: #{tpu_custom_call.1} parent=1 // pred_check_branch
      %99 = sbr.rel (0) target = $region25
    $region24: #{tpu_custom_call.1} parent=1 // pred_region
      %101 = vsyncadd [#allocation4], 0
      %s102 = sshll.u32 [#allocation5], 4
      %s103 = int_to_ptr.vmem [resolvable:$true] %s102
      %s104 = sshll.u32 %s4, 4
      %s105 = int_to_ptr.hbm [resolvable:$true] %s104
      %110 = dma.vmem_to_hbm [thread:$0]  %s103, 256, %s105, [#allocation4], 128, 128, 8
    $region25: #{tpu_custom_call.1} parent=1 // pred_fallthru
      _
    // Predicated region
    $region26: #{tpu_custom_call.1} parent=1 // pred_check
      _
    $region27: #{tpu_custom_call.1} parent=1 // pred_check_branch
      %112 = sbr.rel (0) target = $region29
    $region28: #{tpu_custom_call.1} parent=1 // pred_region
      %114 = dma.done [#allocation4], 256
    $region29: #{tpu_custom_call.1} parent=1 // pred_fallthru
      _
    %115 = vsyncpa [#allocation3], 1
    %116 = vsyncpa [#allocation4], 1

</llo_original>
